<compile_context>
chip_gen: v6e
topology: v6e:2x2x1
jax: 0.10.0
libtpu: 0.0.40
codegen_flags: <defaults>
</compile_context>

<pallas_src>
import functools

import jax
import jax.numpy as jnp
import numpy as np
from jax import lax
from jax.experimental import pallas as pl
from jax.experimental.pallas import tpu as pltpu


def _eca_block_kernel(x_ref, w1_ref, b1_ref, w2_ref, b2_ref, ecam_ref,
                      mask_ref, o_ref, *, tb, seq_len):
    x = x_ref[...]                      # (C, TB*L) f32
    wlen = x.shape[1]

    # Per-sample halo masks (precomputed in wrapper, constant across grid steps).
    pm = mask_ref[0:1, :]               # 0 where l == 0 within a sample
    nm = mask_ref[1:2, :]               # 0 where l == L-1 within a sample

    def conv3(z, wf):
        # Fused 3-tap conv: one (C, 3C) x (3C, TB*L) MXU matmul.
        z_prev = pltpu.roll(z, 1, axis=1) * pm          # x[:, l-1], zero at sample start
        z_next = pltpu.roll(z, wlen - 1, axis=1) * nm   # x[:, l+1], zero at sample end
        zz = jnp.concatenate([z_prev, z, z_next], axis=0)
        return jnp.dot(wf, zz, preferred_element_type=jnp.float32)

    # conv1 + bn1 (scale folded into w1, bias added here) + relu
    out = jnp.maximum(conv3(x, w1_ref[...]) + b1_ref[...], 0.0)
    # conv2 + bn2
    out = conv3(out, w2_ref[...]) + b2_ref[...]

    # ECA per sample: AdaptiveAvgPool1d(1) -> middle tap of depthwise k=3 conv
    # (only tap that sees data on a length-1 signal) -> sigmoid -> rescale,
    # then identity residual + relu.  Static unroll over the TB samples in the tile;
    # every slice is a lane-aligned (C, L) chunk (multiples of 128).
    eca_mid = ecam_ref[...]             # (C, 1)
    for t in range(tb):
        sl = slice(t * seq_len, (t + 1) * seq_len)
        seg = out[:, sl]
        y = jax.nn.sigmoid(jnp.mean(seg, axis=1, keepdims=True) * eca_mid)
        o_ref[:, sl] = jnp.maximum(seg * y + x[:, sl], 0.0).astype(o_ref.dtype)


def _pick_tb(n, seq_len, max_lanes=2048):
    """Largest per-step batch TB with N % TB == 0 and a legal lane-block width,
    block width <= max_lanes; prefer an even grid (helps v7x's 2 TensorCores)."""
    cands = [t for t in range(1, n + 1)
             if n % t == 0 and ((t * seq_len) % 128 == 0 or t == n)]
    fit = [t for t in cands if t * seq_len <= max_lanes] or [min(cands)]
    even = [t for t in fit if (n // t) % 2 == 0]
    return max(even) if even else max(fit)


def eca_basic_block(x, w1, bn1, w2, bn2, eca_w, eps=1e-5, tb=None):
    """x: (N, C, L); w1, w2: (C, C, 3) PyTorch OIW; eca_w: (C, 1, 3);
    bn*: (gamma, beta, running_mean, running_var) each (C,).  Eval-mode BN."""
    n, c, seq_len = x.shape
    if tb is None:
        tb = _pick_tb(n, seq_len)
    assert n % tb == 0
    wb = tb * seq_len

    def fold_bn(p):
        g, b, m, v = p
        inv = g / jnp.sqrt(v + eps)
        return inv, b - m * inv

    def fuse_conv_bn(w, scale):
        # (Cout, Cin, 3) -> (Cout, 3*Cin), column order k*Cin + ci to match the
        # [x_prev; x; x_next] stacking; BN per-output-channel scale folded in.
        wf = jnp.transpose(w, (0, 2, 1)).reshape(c, 3 * c)
        return (scale[:, None] * wf).astype(jnp.float32)

    s1, b1 = fold_bn(bn1)
    s2, b2 = fold_bn(bn2)
    w1f = fuse_conv_bn(w1, s1)
    w2f = fuse_conv_bn(w2, s2)
    b1 = b1.reshape(c, 1).astype(jnp.float32)
    b2 = b2.reshape(c, 1).astype(jnp.float32)
    eca_mid = eca_w[:, 0, 1].reshape(c, 1).astype(jnp.float32)

    # Per-sample conv-halo masks for the flattened layout (identical for every block).
    col = np.arange(wb) % seq_len
    masks = jnp.asarray(np.stack([(col != 0), (col != seq_len - 1)]),
                        dtype=jnp.float32)                         # (2, TB*L)

    # Channels on sublanes, N*L on lanes (wrapper-side layout change).
    xf = jnp.transpose(x, (1, 0, 2)).reshape(c, n * seq_len).astype(jnp.float32)

    kernel = functools.partial(_eca_block_kernel, tb=tb, seq_len=seq_len)
    const = lambda i: (0, 0)

    out_flat = pl.pallas_call(
        kernel,
        out_shape=jax.ShapeDtypeStruct((c, n * seq_len), jnp.float32),
        grid_spec=pltpu.PrefetchScalarGridSpec(
            num_scalar_prefetch=0,
            grid=(n // tb,),
            in_specs=[
                pl.BlockSpec((c, wb), lambda i: (0, i)),     # activation slab
                pl.BlockSpec((c, 3 * c), const),             # fused conv1+bn1 weight
                pl.BlockSpec((c, 1), const),                 # bn1 bias
                pl.BlockSpec((c, 3 * c), const),             # fused conv2+bn2 weight
                pl.BlockSpec((c, 1), const),                 # bn2 bias
                pl.BlockSpec((c, 1), const),                 # ECA middle tap
                pl.BlockSpec((2, wb), const),                # halo masks
            ],
            out_specs=pl.BlockSpec((c, wb), lambda i: (0, i)),
        ),
        compiler_params=pltpu.CompilerParams(
            dimension_semantics=("parallel",),
            vmem_limit_bytes=32 * 1024 * 1024,  # explicit, safe on v5e/v6e/v7x
        ),
    )(xf, w1f, b1, w2f, b2, eca_mid, masks)

    return out_flat.reshape(c, n, seq_len).transpose(1, 0, 2)


def ref_forward(x, w1, bn1, w2, bn2, eca_w, eps=1e-5):
    """Pure-JAX reference (eval-mode BN semantics) for a sanity check."""
    c = x.shape[1]

    def conv(z, w):
        return lax.conv_general_dilated(z, w, (1,), ((1, 1),),
                                        dimension_numbers=("NCH", "OIH", "NCH"))

    def bn(z, p):
        g, b, m, v = p
        return (z - m[None, :, None]) / jnp.sqrt(v[None, :, None] + eps) \
            * g[None, :, None] + b[None, :, None]

    out = jax.nn.relu(bn(conv(x, w1), bn1))
    out = bn(conv(out, w2), bn2)
    y = jnp.mean(out, axis=2, keepdims=True)                       # AdaptiveAvgPool1d(1)
    y = lax.conv_general_dilated(y, eca_w, (1,), ((1, 1),),
                                 dimension_numbers=("NCH", "OIH", "NCH"),
                                 feature_group_count=c)            # depthwise conv
    y = jax.nn.sigmoid(y)
    out = out * y
    return jax.nn.relu(out + x)


if __name__ == "__main__":
    N, C, L = 8, 8, 128  # inplanes == planes, stride=1, downsample=None
    keys = jax.random.split(jax.random.PRNGKey(0), 12)

    x = jax.random.normal(keys[0], (N, C, L), jnp.float32)
    w1 = 0.2 * jax.random.normal(keys[1], (C, C, 3), jnp.float32)
    w2 = 0.2 * jax.random.normal(keys[2], (C, C, 3), jnp.float32)
    eca_w = 0.5 * jax.random.normal(keys[3], (C, 1, 3), jnp.float32)

    bn1 = (1.0 + 0.1 * jax.random.normal(keys[4], (C,), jnp.float32),
           0.1 * jax.random.normal(keys[5], (C,), jnp.float32),
           0.05 * jax.random.normal(keys[6], (C,), jnp.float32),
           1.0 + 0.1 * jnp.abs(jax.random.normal(keys[7], (C,), jnp.float32)))
    bn2 = (1.0 + 0.1 * jax.random.normal(keys[8], (C,), jnp.float32),
           0.1 * jax.random.normal(keys[9], (C,), jnp.float32),
           0.05 * jax.random.normal(keys[10], (C,), jnp.float32),
           1.0 + 0.1 * jnp.abs(jax.random.normal(keys[11], (C,), jnp.float32)))

    out = jax.block_until_ready(eca_basic_block(x, w1, bn1, w2, bn2, eca_w))
    ref = jax.block_until_ready(ref_forward(x, w1, bn1, w2, bn2, eca_w))
    np.testing.assert_allclose(np.asarray(out), np.asarray(ref), rtol=1e-4, atol=1e-4)
    print("KERNEL_OK")
</pallas_src>

<mosaic_0001>
module attributes {stable_mosaic.version = 11 : i64} {
  func.func @_eca_block_kernel(%arg0: i32, %arg1: memref<8x512xf32, #tpu.memory_space<vmem>>, %arg2: memref<8x24xf32, #tpu.memory_space<vmem>>, %arg3: memref<8x1xf32, #tpu.memory_space<vmem>>, %arg4: memref<8x24xf32, #tpu.memory_space<vmem>>, %arg5: memref<8x1xf32, #tpu.memory_space<vmem>>, %arg6: memref<8x1xf32, #tpu.memory_space<vmem>>, %arg7: memref<2x512xf32, #tpu.memory_space<vmem>>, %arg8: memref<8x512xf32, #tpu.memory_space<vmem>>) attributes {dimension_semantics = [#tpu.dimension_semantics<parallel>], iteration_bounds = array<i64: 2>, scalar_prefetch = 0 : i64, scratch_operands = 0 : i64, tpu.core_type = #tpu.core_type<tc>, window_params = [{transform_indices = @transform_0, window_bounds = array<i64: 8, 512>}, {pipeline_mode = #tpu.pipeline_mode<synchronous>, transform_indices = @transform_1, window_bounds = array<i64: 8, 24>}, {pipeline_mode = #tpu.pipeline_mode<synchronous>, transform_indices = @transform_2, window_bounds = array<i64: 8, 1>}, {pipeline_mode = #tpu.pipeline_mode<synchronous>, transform_indices = @transform_3, window_bounds = array<i64: 8, 24>}, {pipeline_mode = #tpu.pipeline_mode<synchronous>, transform_indices = @transform_4, window_bounds = array<i64: 8, 1>}, {pipeline_mode = #tpu.pipeline_mode<synchronous>, transform_indices = @transform_5, window_bounds = array<i64: 8, 1>}, {pipeline_mode = #tpu.pipeline_mode<synchronous>, transform_indices = @transform_6, window_bounds = array<i64: 2, 512>}, {transform_indices = @transform_7, window_bounds = array<i64: 8, 512>}]} {
    %c0 = arith.constant 0 : index
    %c0_0 = arith.constant 0 : index
    %0 = vector.load %arg1[%c0, %c0_0] : memref<8x512xf32, #tpu.memory_space<vmem>>, vector<8x512xf32>
    %c0_1 = arith.constant 0 : index
    %c0_2 = arith.constant 0 : index
    %1 = vector.load %arg7[%c0_1, %c0_2] : memref<2x512xf32, #tpu.memory_space<vmem>>, vector<1x512xf32>
    %c1 = arith.constant 1 : index
    %c0_3 = arith.constant 0 : index
    %2 = vector.load %arg7[%c1, %c0_3] : memref<2x512xf32, #tpu.memory_space<vmem>>, vector<1x512xf32>
    %c0_4 = arith.constant 0 : index
    %c0_5 = arith.constant 0 : index
    %3 = vector.load %arg2[%c0_4, %c0_5] : memref<8x24xf32, #tpu.memory_space<vmem>>, vector<8x24xf32>
    %c1_i32 = arith.constant 1 : i32
    %4 = tpu.dynamic_rotate %0 by %c1_i32 dim 1 : vector<8x512xf32>, i32 -> vector<8x512xf32>
    %5 = vector.broadcast %1 : vector<1x512xf32> to vector<8x512xf32>
    %6 = arith.mulf %4, %5 : vector<8x512xf32>
    %c511_i32 = arith.constant 511 : i32
    %7 = tpu.dynamic_rotate %0 by %c511_i32 dim 1 : vector<8x512xf32>, i32 -> vector<8x512xf32>
    %8 = vector.broadcast %2 : vector<1x512xf32> to vector<8x512xf32>
    %9 = arith.mulf %7, %8 : vector<8x512xf32>
    %10 = tpu.concatenate %6, %0, %9 in 0 : vector<8x512xf32>, vector<8x512xf32>, vector<8x512xf32> -> vector<24x512xf32>
    %cst = arith.constant dense<0.000000e+00> : vector<8x512xf32>
    %11 = tpu.matmul %3, %10, %cst {dimension_numbers = #tpu.dot_dimension_numbers<[1], [0], [0], [1], [0, 0, 1, 1], [], []>} : vector<8x24xf32>, vector<24x512xf32>, vector<8x512xf32> -> vector<8x512xf32>
    %c0_6 = arith.constant 0 : index
    %c0_7 = arith.constant 0 : index
    %12 = vector.load %arg3[%c0_6, %c0_7] : memref<8x1xf32, #tpu.memory_space<vmem>>, vector<8x1xf32>
    %13 = vector.broadcast %12 : vector<8x1xf32> to vector<8x512xf32>
    %14 = arith.addf %11, %13 : vector<8x512xf32>
    %cst_8 = arith.constant 0.000000e+00 : f32
    %15 = vector.broadcast %cst_8 : f32 to vector<8x512xf32>
    %16 = arith.maximumf %14, %15 : vector<8x512xf32>
    %c0_9 = arith.constant 0 : index
    %c0_10 = arith.constant 0 : index
    %17 = vector.load %arg4[%c0_9, %c0_10] : memref<8x24xf32, #tpu.memory_space<vmem>>, vector<8x24xf32>
    %c1_i32_11 = arith.constant 1 : i32
    %18 = tpu.dynamic_rotate %16 by %c1_i32_11 dim 1 : vector<8x512xf32>, i32 -> vector<8x512xf32>
    %19 = vector.broadcast %1 : vector<1x512xf32> to vector<8x512xf32>
    %20 = arith.mulf %18, %19 : vector<8x512xf32>
    %c511_i32_12 = arith.constant 511 : i32
    %21 = tpu.dynamic_rotate %16 by %c511_i32_12 dim 1 : vector<8x512xf32>, i32 -> vector<8x512xf32>
    %22 = vector.broadcast %2 : vector<1x512xf32> to vector<8x512xf32>
    %23 = arith.mulf %21, %22 : vector<8x512xf32>
    %24 = tpu.concatenate %20, %16, %23 in 0 : vector<8x512xf32>, vector<8x512xf32>, vector<8x512xf32> -> vector<24x512xf32>
    %cst_13 = arith.constant dense<0.000000e+00> : vector<8x512xf32>
    %25 = tpu.matmul %17, %24, %cst_13 {dimension_numbers = #tpu.dot_dimension_numbers<[1], [0], [0], [1], [0, 0, 1, 1], [], []>} : vector<8x24xf32>, vector<24x512xf32>, vector<8x512xf32> -> vector<8x512xf32>
    %c0_14 = arith.constant 0 : index
    %c0_15 = arith.constant 0 : index
    %26 = vector.load %arg5[%c0_14, %c0_15] : memref<8x1xf32, #tpu.memory_space<vmem>>, vector<8x1xf32>
    %27 = vector.broadcast %26 : vector<8x1xf32> to vector<8x512xf32>
    %28 = arith.addf %25, %27 : vector<8x512xf32>
    %c0_16 = arith.constant 0 : index
    %c0_17 = arith.constant 0 : index
    %29 = vector.load %arg6[%c0_16, %c0_17] : memref<8x1xf32, #tpu.memory_space<vmem>>, vector<8x1xf32>
    %30 = vector.extract_strided_slice %28 {offsets = [0, 0], sizes = [8, 128], strides = [1, 1]} : vector<8x512xf32> to vector<8x128xf32>
    %cst_18 = arith.constant dense<0.000000e+00> : vector<8xf32>
    %31 = vector.multi_reduction <add>, %30, %cst_18 [1] : vector<8x128xf32> to vector<8xf32>
    %32 = vector.shape_cast %31 : vector<8xf32> to vector<8x1xf32>
    %cst_19 = arith.constant 1.280000e+02 : f32
    %33 = vector.broadcast %cst_19 : f32 to vector<8x1xf32>
    %34 = arith.divf %32, %33 : vector<8x1xf32>
    %35 = arith.mulf %34, %29 : vector<8x1xf32>
    %36 = arith.negf %35 : vector<8x1xf32>
    %37 = math.exp %36 : vector<8x1xf32>
    %cst_20 = arith.constant 1.000000e+00 : f32
    %38 = vector.broadcast %cst_20 : f32 to vector<8x1xf32>
    %39 = arith.addf %38, %37 : vector<8x1xf32>
    %40 = arith.divf %38, %39 : vector<8x1xf32>
    %41 = vector.broadcast %40 : vector<8x1xf32> to vector<8x128xf32>
    %42 = arith.mulf %30, %41 : vector<8x128xf32>
    %43 = vector.extract_strided_slice %0 {offsets = [0, 0], sizes = [8, 128], strides = [1, 1]} : vector<8x512xf32> to vector<8x128xf32>
    %44 = arith.addf %42, %43 : vector<8x128xf32>
    %cst_21 = arith.constant 0.000000e+00 : f32
    %45 = vector.broadcast %cst_21 : f32 to vector<8x128xf32>
    %46 = arith.maximumf %44, %45 : vector<8x128xf32>
    %c0_22 = arith.constant 0 : index
    %c0_23 = arith.constant 0 : index
    %47 = vector.load %arg8[%c0_22, %c0_23] : memref<8x512xf32, #tpu.memory_space<vmem>>, vector<8x128xf32>
    tpu.vector_store %arg8[%c0_22, %c0_23], %46 {strides = array<i32>} : memref<8x512xf32, #tpu.memory_space<vmem>>, vector<8x128xf32>,
    %48 = vector.extract_strided_slice %28 {offsets = [0, 128], sizes = [8, 128], strides = [1, 1]} : vector<8x512xf32> to vector<8x128xf32>
    %cst_24 = arith.constant dense<0.000000e+00> : vector<8xf32>
    %49 = vector.multi_reduction <add>, %48, %cst_24 [1] : vector<8x128xf32> to vector<8xf32>
    %50 = vector.shape_cast %49 : vector<8xf32> to vector<8x1xf32>
    %cst_25 = arith.constant 1.280000e+02 : f32
    %51 = vector.broadcast %cst_25 : f32 to vector<8x1xf32>
    %52 = arith.divf %50, %51 : vector<8x1xf32>
    %53 = arith.mulf %52, %29 : vector<8x1xf32>
    %54 = arith.negf %53 : vector<8x1xf32>
    %55 = math.exp %54 : vector<8x1xf32>
    %cst_26 = arith.constant 1.000000e+00 : f32
    %56 = vector.broadcast %cst_26 : f32 to vector<8x1xf32>
    %57 = arith.addf %56, %55 : vector<8x1xf32>
    %58 = arith.divf %56, %57 : vector<8x1xf32>
    %59 = vector.broadcast %58 : vector<8x1xf32> to vector<8x128xf32>
    %60 = arith.mulf %48, %59 : vector<8x128xf32>
    %61 = vector.extract_strided_slice %0 {offsets = [0, 128], sizes = [8, 128], strides = [1, 1]} : vector<8x512xf32> to vector<8x128xf32>
    %62 = arith.addf %60, %61 : vector<8x128xf32>
    %cst_27 = arith.constant 0.000000e+00 : f32
    %63 = vector.broadcast %cst_27 : f32 to vector<8x128xf32>
    %64 = arith.maximumf %62, %63 : vector<8x128xf32>
    %c0_28 = arith.constant 0 : index
    %c128 = arith.constant 128 : index
    %65 = vector.load %arg8[%c0_28, %c128] : memref<8x512xf32, #tpu.memory_space<vmem>>, vector<8x128xf32>
    tpu.vector_store %arg8[%c0_28, %c128], %64 {strides = array<i32>} : memref<8x512xf32, #tpu.memory_space<vmem>>, vector<8x128xf32>,
    %66 = vector.extract_strided_slice %28 {offsets = [0, 256], sizes = [8, 128], strides = [1, 1]} : vector<8x512xf32> to vector<8x128xf32>
    %cst_29 = arith.constant dense<0.000000e+00> : vector<8xf32>
    %67 = vector.multi_reduction <add>, %66, %cst_29 [1] : vector<8x128xf32> to vector<8xf32>
    %68 = vector.shape_cast %67 : vector<8xf32> to vector<8x1xf32>
    %cst_30 = arith.constant 1.280000e+02 : f32
    %69 = vector.broadcast %cst_30 : f32 to vector<8x1xf32>
    %70 = arith.divf %68, %69 : vector<8x1xf32>
    %71 = arith.mulf %70, %29 : vector<8x1xf32>
    %72 = arith.negf %71 : vector<8x1xf32>
    %73 = math.exp %72 : vector<8x1xf32>
    %cst_31 = arith.constant 1.000000e+00 : f32
    %74 = vector.broadcast %cst_31 : f32 to vector<8x1xf32>
    %75 = arith.addf %74, %73 : vector<8x1xf32>
    %76 = arith.divf %74, %75 : vector<8x1xf32>
    %77 = vector.broadcast %76 : vector<8x1xf32> to vector<8x128xf32>
    %78 = arith.mulf %66, %77 : vector<8x128xf32>
    %79 = vector.extract_strided_slice %0 {offsets = [0, 256], sizes = [8, 128], strides = [1, 1]} : vector<8x512xf32> to vector<8x128xf32>
    %80 = arith.addf %78, %79 : vector<8x128xf32>
    %cst_32 = arith.constant 0.000000e+00 : f32
    %81 = vector.broadcast %cst_32 : f32 to vector<8x128xf32>
    %82 = arith.maximumf %80, %81 : vector<8x128xf32>
    %c0_33 = arith.constant 0 : index
    %c256 = arith.constant 256 : index
    %83 = vector.load %arg8[%c0_33, %c256] : memref<8x512xf32, #tpu.memory_space<vmem>>, vector<8x128xf32>
    tpu.vector_store %arg8[%c0_33, %c256], %82 {strides = array<i32>} : memref<8x512xf32, #tpu.memory_space<vmem>>, vector<8x128xf32>,
    %84 = vector.extract_strided_slice %28 {offsets = [0, 384], sizes = [8, 128], strides = [1, 1]} : vector<8x512xf32> to vector<8x128xf32>
    %cst_34 = arith.constant dense<0.000000e+00> : vector<8xf32>
    %85 = vector.multi_reduction <add>, %84, %cst_34 [1] : vector<8x128xf32> to vector<8xf32>
    %86 = vector.shape_cast %85 : vector<8xf32> to vector<8x1xf32>
    %cst_35 = arith.constant 1.280000e+02 : f32
    %87 = vector.broadcast %cst_35 : f32 to vector<8x1xf32>
    %88 = arith.divf %86, %87 : vector<8x1xf32>
    %89 = arith.mulf %88, %29 : vector<8x1xf32>
    %90 = arith.negf %89 : vector<8x1xf32>
    %91 = math.exp %90 : vector<8x1xf32>
    %cst_36 = arith.constant 1.000000e+00 : f32
    %92 = vector.broadcast %cst_36 : f32 to vector<8x1xf32>
    %93 = arith.addf %92, %91 : vector<8x1xf32>
    %94 = arith.divf %92, %93 : vector<8x1xf32>
    %95 = vector.broadcast %94 : vector<8x1xf32> to vector<8x128xf32>
    %96 = arith.mulf %84, %95 : vector<8x128xf32>
    %97 = vector.extract_strided_slice %0 {offsets = [0, 384], sizes = [8, 128], strides = [1, 1]} : vector<8x512xf32> to vector<8x128xf32>
    %98 = arith.addf %96, %97 : vector<8x128xf32>
    %cst_37 = arith.constant 0.000000e+00 : f32
    %99 = vector.broadcast %cst_37 : f32 to vector<8x128xf32>
    %100 = arith.maximumf %98, %99 : vector<8x128xf32>
    %c0_38 = arith.constant 0 : index
    %c384 = arith.constant 384 : index
    %101 = vector.load %arg8[%c0_38, %c384] : memref<8x512xf32, #tpu.memory_space<vmem>>, vector<8x128xf32>
    tpu.vector_store %arg8[%c0_38, %c384], %100 {strides = array<i32>} : memref<8x512xf32, #tpu.memory_space<vmem>>, vector<8x128xf32>,
    return
  }
  func.func @transform_0(%arg0: i32) -> (i32, i32) {
    %c0_i32 = arith.constant 0 : i32
    %c0_i32_0 = arith.constant 0 : i32
    return %c0_i32, %arg0 : i32, i32
  }
  func.func @transform_1(%arg0: i32) -> (i32, i32) {
    %c0_i32 = arith.constant 0 : i32
    %c0_i32_0 = arith.constant 0 : i32
    %c0_i32_1 = arith.constant 0 : i32
    return %c0_i32, %c0_i32_0 : i32, i32
  }
  func.func @transform_2(%arg0: i32) -> (i32, i32) {
    %c0_i32 = arith.constant 0 : i32
    %c0_i32_0 = arith.constant 0 : i32
    %c0_i32_1 = arith.constant 0 : i32
    return %c0_i32, %c0_i32_0 : i32, i32
  }
  func.func @transform_3(%arg0: i32) -> (i32, i32) {
    %c0_i32 = arith.constant 0 : i32
    %c0_i32_0 = arith.constant 0 : i32
    %c0_i32_1 = arith.constant 0 : i32
    return %c0_i32, %c0_i32_0 : i32, i32
  }
  func.func @transform_4(%arg0: i32) -> (i32, i32) {
    %c0_i32 = arith.constant 0 : i32
    %c0_i32_0 = arith.constant 0 : i32
    %c0_i32_1 = arith.constant 0 : i32
    return %c0_i32, %c0_i32_0 : i32, i32
  }
  func.func @transform_5(%arg0: i32) -> (i32, i32) {
    %c0_i32 = arith.constant 0 : i32
    %c0_i32_0 = arith.constant 0 : i32
    %c0_i32_1 = arith.constant 0 : i32
    return %c0_i32, %c0_i32_0 : i32, i32
  }
  func.func @transform_6(%arg0: i32) -> (i32, i32) {
    %c0_i32 = arith.constant 0 : i32
    %c0_i32_0 = arith.constant 0 : i32
    %c0_i32_1 = arith.constant 0 : i32
    return %c0_i32, %c0_i32_0 : i32, i32
  }
  func.func @transform_7(%arg0: i32) -> (i32, i32) {
    %c0_i32 = arith.constant 0 : i32
    %c0_i32_0 = arith.constant 0 : i32
    return %c0_i32, %arg0 : i32, i32
  }
}

</mosaic_0001>

<llo_original>
// kernel: tpu_custom_call.1
$region0: #{tpu_custom_call.1}
  #allocation0 [shape = 'u32[]', space=smem, size = 0x4, offset = 0x4, fixed_abs, tag = 'smem constant byte address 0x4 - core index']
  #allocation1 [shape = 'u32[144,128]{1,0:T(1,128)}', space=vmem, size = 0x12000, scoped, tag = 'internal scratch']
  %s0 = inlined_call_operand.hbm [shape: f32[8,1024], index: 0, kind: input, shape index: {}]
  %s1 = inlined_call_operand.vmem [shape: f32[8,24], index: 1, kind: input, shape index: {}]
  %s2 = inlined_call_operand.vmem [shape: f32[8,1], index: 2, kind: input, shape index: {}]
  %s3 = inlined_call_operand.vmem [shape: f32[8,24], index: 3, kind: input, shape index: {}]
  %s4 = inlined_call_operand.vmem [shape: f32[8,1], index: 4, kind: input, shape index: {}]
  %s5 = inlined_call_operand.vmem [shape: f32[8,1], index: 5, kind: input, shape index: {}]
  %s6 = inlined_call_operand.vmem [shape: f32[2,512], index: 6, kind: input, shape index: {}]
  %s7 = inlined_call_operand.hbm [shape: f32[8,1024], index: 7, kind: output, shape index: {}]
  %s8 = sld [smem:[#allocation0]]
  $region65: #{tpu_custom_call.1} parent=0
    _
  %s10 = ssub.s32 1, %s8
  %s11 = scalar_select 0, %s10, %s8
  $region1: #{tpu_custom_call.1} parent=0
    #allocation2 [shape = 'u8[32768]{0}', space=vmem, size = 0x8000, scoped, tag = 'input window, operand 0']
    #allocation3 [shape = 's32[2]{0}', space=sflag, size = 0x8, scoped, tag = 'scoped memory for tpu_custom_call.1']
    #allocation4 [shape = 's32[2]{0}', space=sflag, size = 0x8, scoped, tag = 'scoped memory for tpu_custom_call.1']
    #allocation5 [shape = 'u8[32768]{0}', space=vmem, size = 0x8000, scoped, tag = 'output window, operand 0']
    %12 = vsyncpa [#allocation3], 0
    %s13 = scalar_lea.sflag [#allocation3], 1
    %14 = vsyncpa %s13, 0
    %15 = vsyncpa [#allocation4], 0
    %s16 = scalar_lea.sflag [#allocation4], 1
    %17 = vsyncpa %s16, 0
    loop: start=0, step=1, limit=4
    $region2: #{tpu_custom_call.1} parent=1 // loop_pre_header
      _
    $region3: #{tpu_custom_call.1} parent=1 // loop_header
      %s19 = sphi 0, %s23
      %p20 = scmp.ge.s32.totalorder %s19, 4
      %s29 = sphi 0, %s31
      %s32 = sphi 0, %s29
      %s33 = sphi 0, %s32
      %s49 = sphi 0, %s33
      %s53 = sphi 0, %s53
      %s55 = sphi 0, %s53
      %s56 = sphi 0, %s55
      %s70 = sphi 0, %s56
      %s74 = sphi 0, %s74
      %s76 = sphi 0, %s74
      %s77 = sphi 0, %s76
      %s91 = sphi 0, %s77
      %s95 = sphi 0, %s95
      %s97 = sphi 0, %s95
      %s98 = sphi 0, %s97
      %s112 = sphi 0, %s98
      %s116 = sphi 0, %s116
      %s118 = sphi 0, %s116
      %s119 = sphi 0, %s118
      %s133 = sphi 0, %s119
      %s137 = sphi 0, %s137
      %s139 = sphi 0, %s137
      %s140 = sphi 0, %s139
      %s154 = sphi 0, %s140
      %s158 = sphi 0, %s158
      %s160 = sphi 0, %s158
      %s161 = sphi 0, %s160
      %s175 = sphi 0, %s161
      %s181 = sphi 0, %s183
      %s184 = sphi 0, %s181
      %s185 = sphi 0, %s184
      %s201 = sphi 0, %s185
    $region4: #{tpu_custom_call.1} parent=1 // loop_header_branch
      %22 = sbr.rel (%p20) target = $region8
    $region5: #{tpu_custom_call.1} parent=1 // loop_body
      %s24 = ssub.s32 %s19, 1
      %s25 = ssub.s32 %s19, 2
      %s26 = sadd.s32 %s19, 1
      %s27 = ssub.s32 %s19, %s26
      %p28 = scmp.eq.s32.totalorder %s27, 0
      %s30 = sadd.s32 %s29, 1
      %s31 = scalar_select %p28, %s29, %s30
      %p34 = pneg %p28
      %p35 = scmp.eq.s32.totalorder %s19, 1
      %p36 = por %p34, %p35
      %p37 = scmp.ne.s32.totalorder %s29, %s32
      %p38 = scmp.eq.s32.totalorder %s19, 0
      %p39 = por %p37, %p38
      %p40 = scmp.ne.s32.totalorder %s29, %s32
      %p41 = scmp.eq.s32.totalorder %s24, 1
      %p42 = por %p40, %p41
      %p43 = scmp.ne.s32.totalorder %s32, %s33
      %p44 = scmp.eq.s32.totalorder %s24, 0
      %p45 = por %p43, %p44
      %p46 = scmp.ne.s32.totalorder %s32, %s33
      %p47 = scmp.eq.s32.totalorder %s25, 1
      %p48 = por %p46, %p47
      %p50 = scmp.ne.s32.totalorder %s33, %s49
      %p51 = scmp.eq.s32.totalorder %s25, 0
      %p52 = por %p50, %p51
      %s54 = sadd.s32 %s53, 1
      %p57 = scmp.eq.s32.totalorder %s19, 1
      %p58 = scmp.ne.s32.totalorder %s53, %s55
      %p59 = scmp.eq.s32.totalorder %s19, 0
      %p60 = por %p58, %p59
      %p61 = scmp.ne.s32.totalorder %s53, %s55
      %p62 = scmp.eq.s32.totalorder %s24, 1
      %p63 = por %p61, %p62
      %p64 = scmp.ne.s32.totalorder %s55, %s56
      %p65 = scmp.eq.s32.totalorder %s24, 0
      %p66 = por %p64, %p65
      %p67 = scmp.ne.s32.totalorder %s55, %s56
      %p68 = scmp.eq.s32.totalorder %s25, 1
      %p69 = por %p67, %p68
      %p71 = scmp.ne.s32.totalorder %s56, %s70
      %p72 = scmp.eq.s32.totalorder %s25, 0
      %p73 = por %p71, %p72
      %s75 = sadd.s32 %s74, 1
      %p78 = scmp.eq.s32.totalorder %s19, 1
      %p79 = scmp.ne.s32.totalorder %s74, %s76
      %p80 = scmp.eq.s32.totalorder %s19, 0
      %p81 = por %p79, %p80
      %p82 = scmp.ne.s32.totalorder %s74, %s76
      %p83 = scmp.eq.s32.totalorder %s24, 1
      %p84 = por %p82, %p83
      %p85 = scmp.ne.s32.totalorder %s76, %s77
      %p86 = scmp.eq.s32.totalorder %s24, 0
      %p87 = por %p85, %p86
      %p88 = scmp.ne.s32.totalorder %s76, %s77
      %p89 = scmp.eq.s32.totalorder %s25, 1
      %p90 = por %p88, %p89
      %p92 = scmp.ne.s32.totalorder %s77, %s91
      %p93 = scmp.eq.s32.totalorder %s25, 0
      %p94 = por %p92, %p93
      %s96 = sadd.s32 %s95, 1
      %p99 = scmp.eq.s32.totalorder %s19, 1
      %p100 = scmp.ne.s32.totalorder %s95, %s97
      %p101 = scmp.eq.s32.totalorder %s19, 0
      %p102 = por %p100, %p101
      %p103 = scmp.ne.s32.totalorder %s95, %s97
      %p104 = scmp.eq.s32.totalorder %s24, 1
      %p105 = por %p103, %p104
      %p106 = scmp.ne.s32.totalorder %s97, %s98
      %p107 = scmp.eq.s32.totalorder %s24, 0
      %p108 = por %p106, %p107
      %p109 = scmp.ne.s32.totalorder %s97, %s98
      %p110 = scmp.eq.s32.totalorder %s25, 1
      %p111 = por %p109, %p110
      %p113 = scmp.ne.s32.totalorder %s98, %s112
      %p114 = scmp.eq.s32.totalorder %s25, 0
      %p115 = por %p113, %p114
      %s117 = sadd.s32 %s116, 1
      %p120 = scmp.eq.s32.totalorder %s19, 1
      %p121 = scmp.ne.s32.totalorder %s116, %s118
      %p122 = scmp.eq.s32.totalorder %s19, 0
      %p123 = por %p121, %p122
      %p124 = scmp.ne.s32.totalorder %s116, %s118
      %p125 = scmp.eq.s32.totalorder %s24, 1
      %p126 = por %p124, %p125
      %p127 = scmp.ne.s32.totalorder %s118, %s119
      %p128 = scmp.eq.s32.totalorder %s24, 0
      %p129 = por %p127, %p128
      %p130 = scmp.ne.s32.totalorder %s118, %s119
      %p131 = scmp.eq.s32.totalorder %s25, 1
      %p132 = por %p130, %p131
      %p134 = scmp.ne.s32.totalorder %s119, %s133
      %p135 = scmp.eq.s32.totalorder %s25, 0
      %p136 = por %p134, %p135
      %s138 = sadd.s32 %s137, 1
      %p141 = scmp.eq.s32.totalorder %s19, 1
      %p142 = scmp.ne.s32.totalorder %s137, %s139
      %p143 = scmp.eq.s32.totalorder %s19, 0
      %p144 = por %p142, %p143
      %p145 = scmp.ne.s32.totalorder %s137, %s139
      %p146 = scmp.eq.s32.totalorder %s24, 1
      %p147 = por %p145, %p146
      %p148 = scmp.ne.s32.totalorder %s139, %s140
      %p149 = scmp.eq.s32.totalorder %s24, 0
      %p150 = por %p148, %p149
      %p151 = scmp.ne.s32.totalorder %s139, %s140
      %p152 = scmp.eq.s32.totalorder %s25, 1
      %p153 = por %p151, %p152
      %p155 = scmp.ne.s32.totalorder %s140, %s154
      %p156 = scmp.eq.s32.totalorder %s25, 0
      %p157 = por %p155, %p156
      %s159 = sadd.s32 %s158, 1
      %p162 = scmp.eq.s32.totalorder %s19, 1
      %p163 = scmp.ne.s32.totalorder %s158, %s160
      %p164 = scmp.eq.s32.totalorder %s19, 0
      %p165 = por %p163, %p164
      %p166 = scmp.ne.s32.totalorder %s158, %s160
      %p167 = scmp.eq.s32.totalorder %s24, 1
      %p168 = por %p166, %p167
      %p169 = scmp.ne.s32.totalorder %s160, %s161
      %p170 = scmp.eq.s32.totalorder %s24, 0
      %p171 = por %p169, %p170
      %p172 = scmp.ne.s32.totalorder %s160, %s161
      %p173 = scmp.eq.s32.totalorder %s25, 1
      %p174 = por %p172, %p173
      %p176 = scmp.ne.s32.totalorder %s161, %s175
      %p177 = scmp.eq.s32.totalorder %s25, 0
      %p178 = por %p176, %p177
      %s179 = ssub.s32 %s19, %s26
      %p180 = scmp.eq.s32.totalorder %s179, 0
      %s182 = sadd.s32 %s181, 1
      %s183 = scalar_select %p180, %s181, %s182
      %p186 = pneg %p180
      %p187 = scmp.eq.s32.totalorder %s19, 1
      %p188 = por %p186, %p187
      %p189 = scmp.ne.s32.totalorder %s181, %s184
      %p190 = scmp.eq.s32.totalorder %s19, 0
      %p191 = por %p189, %p190
      %p192 = scmp.ne.s32.totalorder %s181, %s184
      %p193 = scmp.eq.s32.totalorder %s24, 1
      %p194 = por %p192, %p193
      %p195 = scmp.ne.s32.totalorder %s184, %s185
      %p196 = scmp.eq.s32.totalorder %s24, 0
      %p197 = por %p195, %p196
      %p198 = scmp.ne.s32.totalorder %s184, %s185
      %p199 = scmp.eq.s32.totalorder %s25, 1
      %p200 = por %p198, %p199
      %p202 = scmp.ne.s32.totalorder %s185, %s201
      %p203 = scmp.eq.s32.totalorder %s25, 0
      %p204 = por %p202, %p203
      %p205 = scmp.le.s32.totalorder 1, %s19
      %p206 = scmp.lt.s32.totalorder %s19, 3
      %p207 = pnand %p205, %p206
      %p208 = pneg %p207
      // Predicated region
      $region9: #{tpu_custom_call.1} parent=5 // pred_check
        _
      $region10: #{tpu_custom_call.1} parent=5 // pred_check_branch
        %210 = sbr.rel (%p207) target = $region12
      $region11: #{tpu_custom_call.1} parent=5 // pred_region
        %s211 = ssub.s32 %s19, 1
        // Predicated region
        $region13: #{tpu_custom_call.1} parent=11 // pred_check
          %p212 = pneg %p66
        $region14: #{tpu_custom_call.1} parent=11 // pred_check_branch
          %214 = sbr.rel (%p212) target = $region16
        $region15: #{tpu_custom_call.1} parent=11 // pred_region
          _
        $region16: #{tpu_custom_call.1} parent=11 // pred_fallthru
          _
        // Predicated region
        $region17: #{tpu_custom_call.1} parent=11 // pred_check
          %p215 = pneg %p87
        $region18: #{tpu_custom_call.1} parent=11 // pred_check_branch
          %217 = sbr.rel (%p215) target = $region20
        $region19: #{tpu_custom_call.1} parent=11 // pred_region
          _
        $region20: #{tpu_custom_call.1} parent=11 // pred_fallthru
          _
        // Predicated region
        $region21: #{tpu_custom_call.1} parent=11 // pred_check
          %p218 = pneg %p108
        $region22: #{tpu_custom_call.1} parent=11 // pred_check_branch
          %220 = sbr.rel (%p218) target = $region24
        $region23: #{tpu_custom_call.1} parent=11 // pred_region
          _
        $region24: #{tpu_custom_call.1} parent=11 // pred_fallthru
          _
        // Predicated region
        $region25: #{tpu_custom_call.1} parent=11 // pred_check
          %p221 = pneg %p129
        $region26: #{tpu_custom_call.1} parent=11 // pred_check_branch
          %223 = sbr.rel (%p221) target = $region28
        $region27: #{tpu_custom_call.1} parent=11 // pred_region
          _
        $region28: #{tpu_custom_call.1} parent=11 // pred_fallthru
          _
        // Predicated region
        $region29: #{tpu_custom_call.1} parent=11 // pred_check
          %p224 = pneg %p150
        $region30: #{tpu_custom_call.1} parent=11 // pred_check_branch
          %226 = sbr.rel (%p224) target = $region32
        $region31: #{tpu_custom_call.1} parent=11 // pred_region
          _
        $region32: #{tpu_custom_call.1} parent=11 // pred_fallthru
          _
        // Predicated region
        $region33: #{tpu_custom_call.1} parent=11 // pred_check
          %p227 = pneg %p171
        $region34: #{tpu_custom_call.1} parent=11 // pred_check_branch
          %229 = sbr.rel (%p227) target = $region36
        $region35: #{tpu_custom_call.1} parent=11 // pred_region
          _
        $region36: #{tpu_custom_call.1} parent=11 // pred_fallthru
          _
      $region12: #{tpu_custom_call.1} parent=5 // pred_fallthru
        _
      %p230 = scmp.lt.s32.totalorder %s19, 2
      // Predicated region
      $region37: #{tpu_custom_call.1} parent=5 // pred_check
        %p231 = pneg %p230
      $region38: #{tpu_custom_call.1} parent=5 // pred_check_branch
        %233 = sbr.rel (%p231) target = $region40
      $region39: #{tpu_custom_call.1} parent=5 // pred_region
        // Predicated region
        $region41: #{tpu_custom_call.1} parent=39 // pred_check
          %p234 = pneg %p39
        $region42: #{tpu_custom_call.1} parent=39 // pred_check_branch
          %236 = sbr.rel (%p234) target = $region44
        $region43: #{tpu_custom_call.1} parent=39 // pred_region
          %s237 = sand.u32 %s29, 1
          %s238 = scalar_lea.sflag [#allocation3], %s237
          %s239 = sand.u32 %s29, 1
          %s240 = smul.addr %s239, 32
          %s241 = scalar_lea.vmem [#allocation2], %s240
          %s242 = smul.u32 4, %s19
          %s244 = ssub.s32 512, 512
          %245 = vsyncadd %s238, %s244
          %s246 = smul.addr %s242, 128
          %s247 = scalar_lea.hbm %s0, %s246
          %s249 = sshll.u32 %s241, 4
          %s250 = int_to_ptr.vmem [resolvable:$true] %s249
          %252 = dma.hbm_to_vmem [thread:$0]  %s247, 512, %s250, %s238
        $region44: #{tpu_custom_call.1} parent=39 // pred_fallthru
          _
      $region40: #{tpu_custom_call.1} parent=5 // pred_fallthru
        _
      %p253 = scmp.le.s32.totalorder 1, %s19
      %p254 = scmp.lt.s32.totalorder %s19, 3
      %p255 = pnand %p253, %p254
      %p256 = pneg %p255
      // Predicated region
      $region45: #{tpu_custom_call.1} parent=5 // pred_check
        _
      $region46: #{tpu_custom_call.1} parent=5 // pred_check_branch
        %258 = sbr.rel (%p255) target = $region48
      $region47: #{tpu_custom_call.1} parent=5 // pred_region
        %s259 = ssub.s32 %s19, 1
        %s260 = sand.u32 %s32, 1
        %s261 = scalar_lea.sflag [#allocation3], %s260
        %s262 = sand.u32 %s32, 1
        %s263 = smul.addr %s262, 32
        %s264 = scalar_lea.vmem [#allocation2], %s263
        // Predicated region
        $region49: #{tpu_custom_call.1} parent=47 // pred_check
          %p265 = pneg %p45
        $region50: #{tpu_custom_call.1} parent=47 // pred_check_branch
          %267 = sbr.rel (%p265) target = $region52
        $region51: #{tpu_custom_call.1} parent=47 // pred_region
          %268 = dma.done %s261, 512
        $region52: #{tpu_custom_call.1} parent=47 // pred_fallthru
          _
        %s269 = sand.u32 %s32, 1
        %s270 = scalar_lea.sflag [#allocation3], %s269
        %s271 = sand.u32 %s32, 1
        %s272 = smul.addr %s271, 32
        %s273 = scalar_lea.vmem [#allocation2], %s272
        %p274 = pneg %p45
        %p275 = pneg %p42
        %p276 = pneg %p66
        %p277 = pneg %p63
        %p278 = pneg %p87
        %p279 = pneg %p84
        %p280 = pneg %p108
        %p281 = pneg %p105
        %p282 = pneg %p129
        %p283 = pneg %p126
        %p284 = pneg %p150
        %p285 = pneg %p147
        %p286 = pneg %p171
        %p287 = pneg %p168
        %p288 = pneg %p197
        %p289 = pneg %p194
        %s290 = sand.u32 %s184, 1
        %s291 = scalar_lea.sflag [#allocation4], %s290
        %s292 = sand.u32 %s184, 1
        %s293 = smul.addr %s292, 32
        %s294 = scalar_lea.vmem [#allocation5], %s293
        %s295 = smul.u32 4, %s24
        %s296 = smul.u32 4, %s24
        %v297 = vld [vmem:[%s264] sm:$0xff]
        %v298 = vld [vmem:[%s264 + $0x8] sm:$0xff]
        %v299 = vld [vmem:[%s264 + $0x10] sm:$0xff]
        %v300 = vld [vmem:[%s264 + $0x18] sm:$0xff]
        %v301 = vld [vmem:[%s6] ss:$2 sm:$0xf]
        %s302 = scalar_lea.vmem %s6, 1
        %v303 = vld [vmem:[%s302] ss:$2 sm:$0xf]
        %v304 = vld [vmem:[%s1] sm:$0xff]
        %305 = vrot.lane.b32.xlu0 %v297, 1
        %v306 = vpop.permute.xlu0 %305
        %307 = vrot.lane.b32.xlu0 %v298, 1
        %v308 = vpop.permute.xlu0 %307
        %309 = vrot.lane.b32.xlu0 %v299, 1
        %v310 = vpop.permute.xlu0 %309
        %311 = vrot.lane.b32.xlu0 %v300, 1
        %v312 = vpop.permute.xlu0 %311
        %v313 = vlaneseq
        %v314 = vand.u32 %v313, 127
        %vm315 = vcmp.lt.s32.totalorder %v314, 1
        %v316 = vsel %vm315, %v310, %v312
        %v317 = vsel %vm315, %v308, %v310
        %v318 = vsel %vm315, %v306, %v308
        %v319 = vsel %vm315, %v312, %v306
        %v321 = vlaneseq
        %v322 = vshrl.u32 %v321, 7
        %v323 = vsub.s32 0, %v322
        %v324 = vrot.slane %v301, %v323
        %v325 = vlaneseq
        %v326 = vshrl.u32 %v325, 7
        %v327 = vsub.s32 1, %v326
        %v328 = vrot.slane %v301, %v327
        %v329 = vlaneseq
        %v330 = vshrl.u32 %v329, 7
        %v331 = vsub.s32 2, %v330
        %v332 = vrot.slane %v301, %v331
        %v333 = vlaneseq
        %v334 = vshrl.u32 %v333, 7
        %v335 = vsub.s32 3, %v334
        %v336 = vrot.slane %v301, %v335
        %v341 = vmul.f32 %v319, %v324
        %v342 = vmul.f32 %v318, %v328
        %v343 = vmul.f32 %v317, %v332
        %v344 = vmul.f32 %v316, %v336
        %345 = vrot.lane.b32.xlu0 %v297, 127
        %v346 = vpop.permute.xlu0 %345
        %347 = vrot.lane.b32.xlu0 %v298, 127
        %v348 = vpop.permute.xlu0 %347
        %349 = vrot.lane.b32.xlu0 %v299, 127
        %v350 = vpop.permute.xlu0 %349
        %351 = vrot.lane.b32.xlu0 %v300, 127
        %v352 = vpop.permute.xlu0 %351
        %vm353 = vcmp.lt.s32.totalorder %v314, 127
        %v354 = vsel %vm353, %v350, %v352
        %v355 = vsel %vm353, %v348, %v350
        %v356 = vsel %vm353, %v346, %v348
        %v357 = vsel %vm353, %v352, %v346
        %v359 = vlaneseq
        %v360 = vshrl.u32 %v359, 7
        %v361 = vsub.s32 0, %v360
        %v362 = vrot.slane %v303, %v361
        %v363 = vlaneseq
        %v364 = vshrl.u32 %v363, 7
        %v365 = vsub.s32 1, %v364
        %v366 = vrot.slane %v303, %v365
        %v367 = vlaneseq
        %v368 = vshrl.u32 %v367, 7
        %v369 = vsub.s32 2, %v368
        %v370 = vrot.slane %v303, %v369
        %v371 = vlaneseq
        %v372 = vshrl.u32 %v371, 7
        %v373 = vsub.s32 3, %v372
        %v374 = vrot.slane %v303, %v373
        %v379 = vmul.f32 %v356, %v362
        %v380 = vmul.f32 %v355, %v366
        %v381 = vmul.f32 %v354, %v370
        %v382 = vmul.f32 %v357, %v374
        %v383 = vld [vmem:[%s2] sm:$0xff]
        %385 = vset.pattern.permute.xlu0 0
        %386 = vperm.xlu0 %385, %v383
        %v387 = vpop.permute.xlu0 %386
        %vm389 = vcmask 195584
        %v391 = vsel %vm389, %v304, 0
        %393 = vmatprep.subr.mxu0 0.0
        %394 = vmatpush1.msra.mxu0 0.0
        %395 = vmatprep.subr.mxu0 0.0
        %396 = vmatpush1.msra.mxu0 0.0
        %397 = vmatprep.subr.mxu0 0.0
        %398 = vmatpush1.msra.mxu0 0.0
        %399 = vmatprep.subr.mxu0 0.0
        %400 = vmatpush1.msra.mxu0 0.0
        %401 = vmatprep.subr.mxu0 0.0
        %402 = vmatpush1.msra.mxu0 0.0
        %403 = vmatprep.subr.mxu0 0.0
        %404 = vmatpush1.msra.mxu0 0.0
        %405 = vmatprep.subr.mxu0 0.0
        %406 = vmatpush1.msra.mxu0 0.0
        %407 = vmatprep.subr.mxu0 0.0
        %408 = vmatpush1.msra.mxu0 0.0
        %409 = vmatprep.subr.mxu0 0.0
        %410 = vmatpush1.msra.mxu0 0.0
        %411 = vmatprep.subr.mxu0 0.0
        %412 = vmatpush1.msra.mxu0 0.0
        %413 = vmatprep.subr.mxu0 0.0
        %414 = vmatpush1.msra.mxu0 0.0
        %415 = vmatprep.subr.mxu0 0.0
        %416 = vmatpush1.msra.mxu0 0.0
        %417 = vmatprep.subr.mxu0 0.0
        %418 = vmatpush1.msra.mxu0 0.0
        %419 = vmatprep.subr.mxu0 %v380
        %420 = vmatpush1.msra.mxu0 %v379
        %421 = vmatprep.subr.mxu0 %v298
        %422 = vmatpush1.msra.mxu0 %v297
        %423 = vmatprep.subr.mxu0 %v342
        %424 = vmatpush1.msra.mxu0 %v341
        %425 = vmatprep.subr.mxu0 0.0
        %426 = vmatpush2.msra.mxu0 0.0
        %427 = vmatprep.subr.mxu0 0.0
        %428 = vmatpush2.msra.mxu0 0.0
        %429 = vmatprep.subr.mxu0 0.0
        %430 = vmatpush2.msra.mxu0 0.0
        %431 = vmatprep.subr.mxu0 0.0
        %432 = vmatpush2.msra.mxu0 0.0
        %433 = vmatprep.subr.mxu0 0.0
        %434 = vmatpush2.msra.mxu0 0.0
        %435 = vmatprep.subr.mxu0 0.0
        %436 = vmatpush2.msra.mxu0 0.0
        %437 = vmatprep.subr.mxu0 0.0
        %438 = vmatpush2.msra.mxu0 0.0
        %439 = vmatprep.subr.mxu0 0.0
        %440 = vmatpush2.msra.mxu0 0.0
        %441 = vmatprep.subr.mxu0 0.0
        %442 = vmatpush2.msra.mxu0 0.0
        %443 = vmatprep.subr.mxu0 0.0
        %444 = vmatpush2.msra.mxu0 0.0
        %445 = vmatprep.subr.mxu0 0.0
        %446 = vmatpush2.msra.mxu0 0.0
        %447 = vmatprep.subr.mxu0 0.0
        %448 = vmatpush2.msra.mxu0 0.0
        %449 = vmatprep.subr.mxu0 0.0
        %450 = vmatpush2.msra.mxu0 0.0
        %451 = vmatprep.subr.mxu0 0.0
        %452 = vmatpush2.msra.mxu0 0.0
        %453 = vmatprep.subr.mxu0 0.0
        %454 = vmatpush2.msra.mxu0 0.0
        %455 = vmatprep.subr.mxu0 0.0
        %456 = vmatpush2.msra.mxu0 0.0
        %457 = vmatprep.mubr.f32.mxu0 0.0
        %458 = vmatmul.mubr.f32.gmra.mxu0 %v391
        %v459 = vpop.f32.mrf.mxu0
        %v460 = vadd.f32 %v387, %v459
        %v461 = vpop.f32.mrf.mxu0
        %v462 = vadd.f32 %v387, %v461
        %463 = vdwg.mxu0
        %464 = vmatprep.subr.mxu0 0.0
        %465 = vmatpush1.msra.mxu0 0.0
        %466 = vmatprep.subr.mxu0 0.0
        %467 = vmatpush1.msra.mxu0 0.0
        %468 = vmatprep.subr.mxu0 0.0
        %469 = vmatpush1.msra.mxu0 0.0
        %470 = vmatprep.subr.mxu0 0.0
        %471 = vmatpush1.msra.mxu0 0.0
        %472 = vmatprep.subr.mxu0 0.0
        %473 = vmatpush1.msra.mxu0 0.0
        %474 = vmatprep.subr.mxu0 0.0
        %475 = vmatpush1.msra.mxu0 0.0
        %476 = vmatprep.subr.mxu0 0.0
        %477 = vmatpush1.msra.mxu0 0.0
        %478 = vmatprep.subr.mxu0 0.0
        %479 = vmatpush1.msra.mxu0 0.0
        %480 = vmatprep.subr.mxu0 0.0
        %481 = vmatpush1.msra.mxu0 0.0
        %482 = vmatprep.subr.mxu0 0.0
        %483 = vmatpush1.msra.mxu0 0.0
        %484 = vmatprep.subr.mxu0 0.0
        %485 = vmatpush1.msra.mxu0 0.0
        %486 = vmatprep.subr.mxu0 0.0
        %487 = vmatpush1.msra.mxu0 0.0
        %488 = vmatprep.subr.mxu0 0.0
        %489 = vmatpush1.msra.mxu0 0.0
        %490 = vmatprep.subr.mxu0 %v382
        %491 = vmatpush1.msra.mxu0 %v381
        %492 = vmatprep.subr.mxu0 %v300
        %493 = vmatpush1.msra.mxu0 %v299
        %494 = vmatprep.subr.mxu0 %v344
        %495 = vmatpush1.msra.mxu0 %v343
        %496 = vmatprep.subr.mxu0 0.0
        %497 = vmatpush2.msra.mxu0 0.0
        %498 = vmatprep.subr.mxu0 0.0
        %499 = vmatpush2.msra.mxu0 0.0
        %500 = vmatprep.subr.mxu0 0.0
        %501 = vmatpush2.msra.mxu0 0.0
        %502 = vmatprep.subr.mxu0 0.0
        %503 = vmatpush2.msra.mxu0 0.0
        %504 = vmatprep.subr.mxu0 0.0
        %505 = vmatpush2.msra.mxu0 0.0
        %506 = vmatprep.subr.mxu0 0.0
        %507 = vmatpush2.msra.mxu0 0.0
        %508 = vmatprep.subr.mxu0 0.0
        %509 = vmatpush2.msra.mxu0 0.0
        %510 = vmatprep.subr.mxu0 0.0
        %511 = vmatpush2.msra.mxu0 0.0
        %512 = vmatprep.subr.mxu0 0.0
        %513 = vmatpush2.msra.mxu0 0.0
        %514 = vmatprep.subr.mxu0 0.0
        %515 = vmatpush2.msra.mxu0 0.0
        %516 = vmatprep.subr.mxu0 0.0
        %517 = vmatpush2.msra.mxu0 0.0
        %518 = vmatprep.subr.mxu0 0.0
        %519 = vmatpush2.msra.mxu0 0.0
        %520 = vmatprep.subr.mxu0 0.0
        %521 = vmatpush2.msra.mxu0 0.0
        %522 = vmatprep.subr.mxu0 0.0
        %523 = vmatpush2.msra.mxu0 0.0
        %524 = vmatprep.subr.mxu0 0.0
        %525 = vmatpush2.msra.mxu0 0.0
        %526 = vmatprep.subr.mxu0 0.0
        %527 = vmatpush2.msra.mxu0 0.0
        %528 = vmatprep.mubr.f32.mxu0 0.0
        %529 = vmatmul.mubr.f32.gmra.mxu0 %v391
        %v530 = vpop.f32.mrf.mxu0
        %v531 = vadd.f32 %v387, %v530
        %v532 = vpop.f32.mrf.mxu0
        %v533 = vadd.f32 %v387, %v532
        %534 = vdwg.mxu0
        %v535 = vmax.f32 %v460, 0.0
        %v536 = vmax.f32 %v462, 0.0
        %v537 = vmax.f32 %v531, 0.0
        %v538 = vmax.f32 %v533, 0.0
        %v539 = vld [vmem:[%s3] sm:$0xff]
        %540 = vrot.lane.b32.xlu0 %v535, 1
        %v541 = vpop.permute.xlu0 %540
        %542 = vrot.lane.b32.xlu0 %v536, 1
        %v543 = vpop.permute.xlu0 %542
        %544 = vrot.lane.b32.xlu0 %v537, 1
        %v545 = vpop.permute.xlu0 %544
        %546 = vrot.lane.b32.xlu0 %v538, 1
        %v547 = vpop.permute.xlu0 %546
        %v548 = vsel %vm315, %v545, %v547
        %v549 = vsel %vm315, %v543, %v545
        %v550 = vsel %vm315, %v541, %v543
        %v551 = vsel %vm315, %v547, %v541
        %v552 = vmul.f32 %v551, %v324
        %v553 = vmul.f32 %v550, %v328
        %v554 = vmul.f32 %v549, %v332
        %v555 = vmul.f32 %v548, %v336
        %556 = vrot.lane.b32.xlu0 %v535, 127
        %v557 = vpop.permute.xlu0 %556
        %558 = vrot.lane.b32.xlu0 %v536, 127
        %v559 = vpop.permute.xlu0 %558
        %560 = vrot.lane.b32.xlu0 %v537, 127
        %v561 = vpop.permute.xlu0 %560
        %562 = vrot.lane.b32.xlu0 %v538, 127
        %v563 = vpop.permute.xlu0 %562
        %v564 = vsel %vm353, %v561, %v563
        %v565 = vsel %vm353, %v559, %v561
        %v566 = vsel %vm353, %v557, %v559
        %v567 = vsel %vm353, %v563, %v557
        %v568 = vmul.f32 %v566, %v362
        %v569 = vmul.f32 %v565, %v366
        %v570 = vmul.f32 %v564, %v370
        %v571 = vmul.f32 %v567, %v374
        %v572 = vld [vmem:[%s4] sm:$0xff]
        %574 = vset.pattern.permute.xlu0 0
        %575 = vperm.xlu0 %574, %v572
        %v576 = vpop.permute.xlu0 %575
        %v579 = vsel %vm389, %v539, 0
        %581 = vmatprep.subr.mxu0 0.0
        %582 = vmatpush1.msra.mxu0 0.0
        %583 = vmatprep.subr.mxu0 0.0
        %584 = vmatpush1.msra.mxu0 0.0
        %585 = vmatprep.subr.mxu0 0.0
        %586 = vmatpush1.msra.mxu0 0.0
        %587 = vmatprep.subr.mxu0 0.0
        %588 = vmatpush1.msra.mxu0 0.0
        %589 = vmatprep.subr.mxu0 0.0
        %590 = vmatpush1.msra.mxu0 0.0
        %591 = vmatprep.subr.mxu0 0.0
        %592 = vmatpush1.msra.mxu0 0.0
        %593 = vmatprep.subr.mxu0 0.0
        %594 = vmatpush1.msra.mxu0 0.0
        %595 = vmatprep.subr.mxu0 0.0
        %596 = vmatpush1.msra.mxu0 0.0
        %597 = vmatprep.subr.mxu0 0.0
        %598 = vmatpush1.msra.mxu0 0.0
        %599 = vmatprep.subr.mxu0 0.0
        %600 = vmatpush1.msra.mxu0 0.0
        %601 = vmatprep.subr.mxu0 0.0
        %602 = vmatpush1.msra.mxu0 0.0
        %603 = vmatprep.subr.mxu0 0.0
        %604 = vmatpush1.msra.mxu0 0.0
        %605 = vmatprep.subr.mxu0 0.0
        %606 = vmatpush1.msra.mxu0 0.0
        %607 = vmatprep.subr.mxu0 %v569
        %608 = vmatpush1.msra.mxu0 %v568
        %609 = vmatprep.subr.mxu0 %v536
        %610 = vmatpush1.msra.mxu0 %v535
        %611 = vmatprep.subr.mxu0 %v553
        %612 = vmatpush1.msra.mxu0 %v552
        %613 = vmatprep.subr.mxu0 0.0
        %614 = vmatpush2.msra.mxu0 0.0
        %615 = vmatprep.subr.mxu0 0.0
        %616 = vmatpush2.msra.mxu0 0.0
        %617 = vmatprep.subr.mxu0 0.0
        %618 = vmatpush2.msra.mxu0 0.0
        %619 = vmatprep.subr.mxu0 0.0
        %620 = vmatpush2.msra.mxu0 0.0
        %621 = vmatprep.subr.mxu0 0.0
        %622 = vmatpush2.msra.mxu0 0.0
        %623 = vmatprep.subr.mxu0 0.0
        %624 = vmatpush2.msra.mxu0 0.0
        %625 = vmatprep.subr.mxu0 0.0
        %626 = vmatpush2.msra.mxu0 0.0
        %627 = vmatprep.subr.mxu0 0.0
        %628 = vmatpush2.msra.mxu0 0.0
        %629 = vmatprep.subr.mxu0 0.0
        %630 = vmatpush2.msra.mxu0 0.0
        %631 = vmatprep.subr.mxu0 0.0
        %632 = vmatpush2.msra.mxu0 0.0
        %633 = vmatprep.subr.mxu0 0.0
        %634 = vmatpush2.msra.mxu0 0.0
        %635 = vmatprep.subr.mxu0 0.0
        %636 = vmatpush2.msra.mxu0 0.0
        %637 = vmatprep.subr.mxu0 0.0
        %638 = vmatpush2.msra.mxu0 0.0
        %639 = vmatprep.subr.mxu0 0.0
        %640 = vmatpush2.msra.mxu0 0.0
        %641 = vmatprep.subr.mxu0 0.0
        %642 = vmatpush2.msra.mxu0 0.0
        %643 = vmatprep.subr.mxu0 0.0
        %644 = vmatpush2.msra.mxu0 0.0
        %645 = vmatprep.mubr.f32.mxu0 0.0
        %646 = vmatmul.mubr.f32.gmra.mxu0 %v579
        %v647 = vpop.f32.mrf.mxu0
        %v648 = vadd.f32 %v576, %v647
        %v649 = vpop.f32.mrf.mxu0
        %v650 = vadd.f32 %v576, %v649
        %651 = vdwg.mxu0
        %652 = vmatprep.subr.mxu0 0.0
        %653 = vmatpush1.msra.mxu0 0.0
        %654 = vmatprep.subr.mxu0 0.0
        %655 = vmatpush1.msra.mxu0 0.0
        %656 = vmatprep.subr.mxu0 0.0
        %657 = vmatpush1.msra.mxu0 0.0
        %658 = vmatprep.subr.mxu0 0.0
        %659 = vmatpush1.msra.mxu0 0.0
        %660 = vmatprep.subr.mxu0 0.0
        %661 = vmatpush1.msra.mxu0 0.0
        %662 = vmatprep.subr.mxu0 0.0
        %663 = vmatpush1.msra.mxu0 0.0
        %664 = vmatprep.subr.mxu0 0.0
        %665 = vmatpush1.msra.mxu0 0.0
        %666 = vmatprep.subr.mxu0 0.0
        %667 = vmatpush1.msra.mxu0 0.0
        %668 = vmatprep.subr.mxu0 0.0
        %669 = vmatpush1.msra.mxu0 0.0
        %670 = vmatprep.subr.mxu0 0.0
        %671 = vmatpush1.msra.mxu0 0.0
        %672 = vmatprep.subr.mxu0 0.0
        %673 = vmatpush1.msra.mxu0 0.0
        %674 = vmatprep.subr.mxu0 0.0
        %675 = vmatpush1.msra.mxu0 0.0
        %676 = vmatprep.subr.mxu0 0.0
        %677 = vmatpush1.msra.mxu0 0.0
        %678 = vmatprep.subr.mxu0 %v571
        %679 = vmatpush1.msra.mxu0 %v570
        %680 = vmatprep.subr.mxu0 %v538
        %681 = vmatpush1.msra.mxu0 %v537
        %682 = vmatprep.subr.mxu0 %v555
        %683 = vmatpush1.msra.mxu0 %v554
        %684 = vmatprep.subr.mxu0 0.0
        %685 = vmatpush2.msra.mxu0 0.0
        %686 = vmatprep.subr.mxu0 0.0
        %687 = vmatpush2.msra.mxu0 0.0
        %688 = vmatprep.subr.mxu0 0.0
        %689 = vmatpush2.msra.mxu0 0.0
        %690 = vmatprep.subr.mxu0 0.0
        %691 = vmatpush2.msra.mxu0 0.0
        %692 = vmatprep.subr.mxu0 0.0
        %693 = vmatpush2.msra.mxu0 0.0
        %694 = vmatprep.subr.mxu0 0.0
        %695 = vmatpush2.msra.mxu0 0.0
        %696 = vmatprep.subr.mxu0 0.0
        %697 = vmatpush2.msra.mxu0 0.0
        %698 = vmatprep.subr.mxu0 0.0
        %699 = vmatpush2.msra.mxu0 0.0
        %700 = vmatprep.subr.mxu0 0.0
        %701 = vmatpush2.msra.mxu0 0.0
        %702 = vmatprep.subr.mxu0 0.0
        %703 = vmatpush2.msra.mxu0 0.0
        %704 = vmatprep.subr.mxu0 0.0
        %705 = vmatpush2.msra.mxu0 0.0
        %706 = vmatprep.subr.mxu0 0.0
        %707 = vmatpush2.msra.mxu0 0.0
        %708 = vmatprep.subr.mxu0 0.0
        %709 = vmatpush2.msra.mxu0 0.0
        %710 = vmatprep.subr.mxu0 0.0
        %711 = vmatpush2.msra.mxu0 0.0
        %712 = vmatprep.subr.mxu0 0.0
        %713 = vmatpush2.msra.mxu0 0.0
        %714 = vmatprep.subr.mxu0 0.0
        %715 = vmatpush2.msra.mxu0 0.0
        %716 = vmatprep.mubr.f32.mxu0 0.0
        %717 = vmatmul.mubr.f32.gmra.mxu0 %v579
        %v718 = vpop.f32.mrf.mxu0
        %v719 = vadd.f32 %v576, %v718
        %v720 = vpop.f32.mrf.mxu0
        %v721 = vadd.f32 %v576, %v720
        %722 = vdwg.mxu0
        %v723 = vld [vmem:[%s5] sm:$0xff]
        %724 = vadd.xlane.f32.xlu0 %v648
        %v725 = vpop.xlane.xlu0 %724
        %v726 = vrcp.pop 128.0
        %v727 = vmul.f32 %v725, %v726
        %v728 = vmul.f32 %v727, %v723
        %v729 = vxor.u32 %v728, 2147483648
        %v730 = vmul.f32 %v729, 1.442695
        %v731 = vpow.pop %v730
        %v732 = vadd.f32 %v731, 1.0
        %v733 = vrcp.pop %v732
        %v734 = vmul.f32 1.0, %v733
        %736 = vset.pattern.permute.xlu0 0
        %737 = vperm.xlu0 %736, %v734
        %v738 = vpop.permute.xlu0 %737
        %v740 = vmul.f32 %v648, %v738
        %v741 = vadd.f32 %v740, %v297
        %v742 = vmax.f32 %v741, 0.0
        %743 = vst [vmem:[%s294] sm:$0xff] %v742
        %744 = vadd.xlane.f32.xlu0 %v650
        %v745 = vpop.xlane.xlu0 %744
        %v746 = vmul.f32 %v745, %v726
        %v747 = vmul.f32 %v746, %v723
        %v748 = vxor.u32 %v747, 2147483648
        %v749 = vmul.f32 %v748, 1.442695
        %v750 = vpow.pop %v749
        %v751 = vadd.f32 %v750, 1.0
        %v752 = vrcp.pop %v751
        %v753 = vmul.f32 1.0, %v752
        %755 = vset.pattern.permute.xlu0 0
        %756 = vperm.xlu0 %755, %v753
        %v757 = vpop.permute.xlu0 %756
        %v759 = vmul.f32 %v650, %v757
        %v760 = vadd.f32 %v759, %v298
        %v761 = vmax.f32 %v760, 0.0
        %762 = vst [vmem:[%s294 + $0x8] sm:$0xff] %v761
        %763 = vadd.xlane.f32.xlu0 %v719
        %v764 = vpop.xlane.xlu0 %763
        %v765 = vmul.f32 %v764, %v726
        %v766 = vmul.f32 %v765, %v723
        %v767 = vxor.u32 %v766, 2147483648
        %v768 = vmul.f32 %v767, 1.442695
        %v769 = vpow.pop %v768
        %v770 = vadd.f32 %v769, 1.0
        %v771 = vrcp.pop %v770
        %v772 = vmul.f32 1.0, %v771
        %774 = vset.pattern.permute.xlu0 0
        %775 = vperm.xlu0 %774, %v772
        %v776 = vpop.permute.xlu0 %775
        %v778 = vmul.f32 %v719, %v776
        %v779 = vadd.f32 %v778, %v299
        %v780 = vmax.f32 %v779, 0.0
        %781 = vst [vmem:[%s294 + $0x10] sm:$0xff] %v780
        %782 = vadd.xlane.f32.xlu0 %v721
        %v783 = vpop.xlane.xlu0 %782
        %v784 = vmul.f32 %v783, %v726
        %v785 = vmul.f32 %v784, %v723
        %v786 = vxor.u32 %v785, 2147483648
        %v787 = vmul.f32 %v786, 1.442695
        %v788 = vpow.pop %v787
        %v789 = vadd.f32 %v788, 1.0
        %v790 = vrcp.pop %v789
        %v791 = vmul.f32 1.0, %v790
        %793 = vset.pattern.permute.xlu0 0
        %794 = vperm.xlu0 %793, %v791
        %v795 = vpop.permute.xlu0 %794
        %v797 = vmul.f32 %v721, %v795
        %v798 = vadd.f32 %v797, %v300
        %v799 = vmax.f32 %v798, 0.0
        %800 = vst [vmem:[%s294 + $0x18] sm:$0xff] %v799
        %s801 = sand.u32 %s184, 1
        %s802 = scalar_lea.sflag [#allocation4], %s801
        %s803 = sand.u32 %s184, 1
        %s804 = smul.addr %s803, 32
        %s805 = scalar_lea.vmem [#allocation5], %s804
        // Predicated region
        $region53: #{tpu_custom_call.1} parent=47 // pred_check
          %p806 = pneg %p194
        $region54: #{tpu_custom_call.1} parent=47 // pred_check_branch
          %808 = sbr.rel (%p806) target = $region56
        $region55: #{tpu_custom_call.1} parent=47 // pred_region
          %s809 = smul.u32 4, %s24
          %s811 = ssub.s32 512, 512
          %812 = vsyncadd %s802, %s811
          %s813 = smul.addr %s809, 128
          %s814 = scalar_lea.hbm %s7, %s813
          %s816 = sshll.u32 %s805, 4
          %s817 = int_to_ptr.vmem [resolvable:$true] %s816
          %819 = dma.vmem_to_hbm [thread:$0]  %s817, 512, %s814, %s802
        $region56: #{tpu_custom_call.1} parent=47 // pred_fallthru
          _
      $region48: #{tpu_custom_call.1} parent=5 // pred_fallthru
        _
      %p820 = scmp.le.s32.totalorder 2, %s19
      // Predicated region
      $region57: #{tpu_custom_call.1} parent=5 // pred_check
        %p821 = pneg %p820
      $region58: #{tpu_custom_call.1} parent=5 // pred_check_branch
        %823 = sbr.rel (%p821) target = $region60
      $region59: #{tpu_custom_call.1} parent=5 // pred_region
        %s824 = ssub.s32 %s19, 2
        // Predicated region
        $region61: #{tpu_custom_call.1} parent=59 // pred_check
          %p825 = pneg %p200
        $region62: #{tpu_custom_call.1} parent=59 // pred_check_branch
          %827 = sbr.rel (%p825) target = $region64
        $region63: #{tpu_custom_call.1} parent=59 // pred_region
          %s828 = sand.u32 %s185, 1
          %s829 = scalar_lea.sflag [#allocation4], %s828
          %s830 = sand.u32 %s185, 1
          %s831 = smul.addr %s830, 32
          %s832 = scalar_lea.vmem [#allocation5], %s831
          %833 = dma.done %s829, 512
        $region64: #{tpu_custom_call.1} parent=59 // pred_fallthru
          _
      $region60: #{tpu_custom_call.1} parent=5 // pred_fallthru
        _
    $region6: #{tpu_custom_call.1} parent=1 // loop_footer
      %s23 = sadd.s32 1, %s19
    $region7: #{tpu_custom_call.1} parent=1 // loop_footer_branch
      %18 = sbr.rel target = $region3
    $region8: #{tpu_custom_call.1} parent=1 // loop_exit
      _
    %834 = vsyncpa [#allocation3], 1
    %s835 = scalar_lea.sflag [#allocation3], 1
    %836 = vsyncpa %s835, 1
    %837 = vsyncpa [#allocation4], 1
    %s838 = scalar_lea.sflag [#allocation4], 1
    %839 = vsyncpa %s838, 1

</llo_original>
